<compile_context>
chip_gen: v5e
topology: v5e:2x2
jax: 0.10.0
libtpu: 0.0.40
codegen_flags: <defaults>
</compile_context>

<pallas_src>
import functools

import jax
import jax.numpy as jnp
from jax.experimental import pallas as pl
from jax.experimental.pallas import tpu as pltpu


def _round_up(x, m):
    return (x + m - 1) // m * m


def _mmd_tile_kernel(ii_ref, jj_ref, w_ref, nib_ref,      # scalar-prefetch refs (SMEM)
                     a_ref, b_ref, sqb_ref,               # (T, D), (T, D), (1, 1, T)
                     out_ref,                             # (1, 8, 128) per-core partial
                     acc_ref,                             # (num_cores,) SMEM accumulator
                     *, batch_size, n_real, kernel_num, tile, n_per_core,
                     use_squaring, exp_dtype):
    c = pl.program_id(0)                                   # core slot ("parallel")
    g = pl.program_id(1)                                   # tile-pair step ("arbitrary")
    idx = c * n_per_core + g

    @pl.when(g == 0)
    def _():
        acc_ref[c] = jnp.float32(0.0)

    a = a_ref[...].astype(jnp.float32)                     # (T, D)
    b = b_ref[...].astype(jnp.float32)                     # (T, D)

    # Pairwise squared-L2 distances for this tile pair. j-side row norms arrive
    # prefetched lane-dense (no per-step cross-lane reduce / transpose); i-side
    # norm is one keepdims reduce on an already-resident tile.
    sq_a = jnp.sum(a * a, axis=1, keepdims=True)           # (T, 1)
    sq_b = sqb_ref[0]                                      # (1, T)
    gram = jax.lax.dot_general(a, b, (((1,), (1,)), ((), ())),
                               preferred_element_type=jnp.float32)   # (T, T) on MXU
    dist = jnp.maximum(sq_a + sq_b - 2.0 * gram, 0.0)      # clamp tiny FP negatives

    # Multi-scale Gaussian kernel: sum_s exp(dist * nib[s]).
    if use_squaring:
        # kernel_mul == 2: nib[s-1] == 2*nib[s]  =>  exp(d*nib[s-1]) = exp(d*nib[s])^2.
        # One EUP exp (largest bandwidth) + (kernel_num-1) VPU squarings; chaining
        # from the largest bandwidth only underflows where the true value does.
        e = jnp.exp((dist * nib_ref[kernel_num - 1]).astype(exp_dtype))
        kern = e
        for _ in range(kernel_num - 1):
            e = e * e
            kern = kern + e
    else:
        kern = jnp.exp((dist * nib_ref[0]).astype(exp_dtype))
        for s in range(1, kernel_num):
            kern = kern + jnp.exp((dist * nib_ref[s]).astype(exp_dtype))

    # Signed quadrant weights with padded-row masking: +1 source, -1 target, 0 pad.
    row0 = ii_ref[idx] * tile
    col0 = jj_ref[idx] * tile
    ri = row0 + jax.lax.broadcasted_iota(jnp.int32, (tile, 1), 0)
    cj = col0 + jax.lax.broadcasted_iota(jnp.int32, (tile, 1), 0)
    s_i = jnp.where(ri < n_real, jnp.where(ri < batch_size, 1.0, -1.0), 0.0)
    s_j = jnp.where(cj < n_real, jnp.where(cj < batch_size, 1.0, -1.0), 0.0)

    # Signed tile reduction as an MXU matvec: s_i^T . (kern @ s_j); f32 accumulate
    # even when kern is bf16 (v6e/v7x fast path).
    col_red = jax.lax.dot_general(kern, s_j.astype(kern.dtype),
                                  (((1,), (0,)), ((), ())),
                                  preferred_element_type=jnp.float32)  # (T, 1)
    partial = jnp.sum(s_i.astype(jnp.float32) * col_red)

    # w folds the 2x symmetry weight for off-diagonal tile pairs and zeroes the
    # dummy (load-balancing padding) pairs.
    acc_ref[c] += w_ref[idx] * partial

    @pl.when(g == n_per_core - 1)
    def _():
        out_ref[...] = acc_ref[c] + jnp.zeros((1, 8, 128), jnp.float32)


def _default_num_cores():
    """2 TensorCores per chip on v7x (split the pair grid); 1 on v5e/v6e."""
    try:
        kind = jax.devices()[0].device_kind.lower()
    except Exception:
        return 1
    return 2 if ("v7" in kind or "7x" in kind) else 1


def _bf16_exp_ok():
    """bf16 EUP/VPU exist on v6e/v7x only (v5e has no bf16 vector path)."""
    try:
        kind = jax.devices()[0].device_kind.lower()
    except Exception:
        return False
    return any(t in kind for t in ("v6", "v7", "7x"))


def _pick_tile(n, d, max_tile, vmem_budget_bytes=40 * 1024 * 1024):
    """Row tile: multiple of 8, <= max_tile, working set capped by a VMEM budget.

    Never falls back to a monolithic N x N tile: the caller pads N up to a tile
    multiple instead (padded rows are masked inside the kernel).
    """
    t = min(_round_up(max(n, 8), 8), _round_up(max_tile, 8))
    while t > 8:
        # 2 inputs x 2 pipeline buffers x (t, d) f32  +  ~6 (t, t) f32 intermediates
        need = 2 * 2 * t * d * 4 + 6 * t * t * 4
        if need <= vmem_budget_bytes:
            break
        t -= 8
    return max(t, 8)


def mmd_loss(source, target, kernel_mul=2.0, kernel_num=5, *,
             max_tile=256, num_cores=None, exp_dtype=None):
    """Pallas TPU MMD_loss.forward (L2 kernel, symmetric='yes', fix_sigma=None).

    exp_dtype=jnp.bfloat16 enables the v6e/v7x bf16 exp fast path (f32 default).
    """
    source = jnp.asarray(source, jnp.float32)
    target = jnp.asarray(target, jnp.float32)
    batch_size = int(source.shape[0])
    total = jnp.concatenate([source, target], axis=0)      # (N, D)
    n, d = int(total.shape[0]), int(total.shape[1])

    # Pairwise distances are translation invariant: centering (O(N*D)) removes
    # catastrophic cancellation in the closed-form distance sum and conditions
    # the in-kernel sq_a + sq_b - 2*gram expansion.
    total = total - jnp.mean(total, axis=0, keepdims=True)

    # Closed-form sum of all pairwise squared L2 distances (exact, O(N*D)):
    #   sum_ij ||t_i - t_j||^2 = 2*N*sum_i ||t_i||^2 - 2*||sum_i t_i||^2
    sq = jnp.sum(total * total, axis=1)                    # (N,) row norms (reused below)
    col_sum = jnp.sum(total, axis=0)
    sum_dist = 2.0 * n * jnp.sum(sq) - 2.0 * jnp.dot(col_sum, col_sum)
    bandwidth = sum_dist / float(n * n - n)
    bandwidth = bandwidth / (kernel_mul ** (kernel_num // 2))
    # NOTE: all-identical rows -> bandwidth 0 -> NaN/Inf, same as the reference.
    neg_inv_bw = jnp.asarray([-1.0 / (kernel_mul ** i) for i in range(kernel_num)],
                             dtype=jnp.float32) / bandwidth

    # ---- tiling (pad N up to a tile multiple; padded rows masked in-kernel) ----
    tile = _pick_tile(n, d, max_tile)
    nt = -(-n // tile)
    n_pad = nt * tile
    if n_pad != n:
        total = jnp.pad(total, ((0, n_pad - n), (0, 0)))
        sq = jnp.pad(sq, (0, n_pad - n))
    sq_rows = sq.reshape(nt, 1, tile)                      # lane-dense j-side row norms

    # ---- upper-triangular tile pairs, interleaved across cores ----
    pairs = [(i, j) for i in range(nt) for j in range(i, nt)]
    if num_cores is None:
        num_cores = _default_num_cores()
    num_cores = max(1, int(num_cores))
    n_per_core = -(-len(pairs) // num_cores)
    ii = [0] * (num_cores * n_per_core)
    jj = [0] * (num_cores * n_per_core)
    ww = [0.0] * (num_cores * n_per_core)                  # 0.0 => dummy padding pair
    for k, (i, j) in enumerate(pairs):
        slot = (k % num_cores) * n_per_core + (k // num_cores)
        ii[slot] = i
        jj[slot] = j
        ww[slot] = 1.0 if i == j else 2.0                  # off-diag covered twice by symmetry
    ii = jnp.asarray(ii, jnp.int32)
    jj = jnp.asarray(jj, jnp.int32)
    ww = jnp.asarray(ww, jnp.float32)

    exp_dt = jnp.float32 if exp_dtype is None else exp_dtype
    use_squaring = (float(kernel_mul) == 2.0) and kernel_num > 1

    kernel = functools.partial(
        _mmd_tile_kernel, batch_size=batch_size, n_real=n, kernel_num=kernel_num,
        tile=tile, n_per_core=n_per_core, use_squaring=use_squaring,
        exp_dtype=exp_dt)

    G = n_per_core

    def a_map(c, g, ii_r, jj_r, w_r, nib_r):
        return (ii_r[c * G + g], 0)

    def b_map(c, g, ii_r, jj_r, w_r, nib_r):
        return (jj_r[c * G + g], 0)

    def sq_map(c, g, ii_r, jj_r, w_r, nib_r):
        return (jj_r[c * G + g], 0, 0)

    def out_map(c, g, ii_r, jj_r, w_r, nib_r):
        return (c, 0, 0)

    # VMEM hygiene per generation: scoped default is ~16 MiB (v5e) / 32 MiB
    # (v6e/v7x); v7x physical is only 64 MiB, so cap the explicit request.
    need = 2 * 2 * tile * d * 4 + 6 * tile * tile * 4 + 4 * tile * 4 + 2 * 8 * 128 * 4
    vmem_limit = int(min(max(2 * need, 32 * 1024 * 1024), 56 * 1024 * 1024))

    grid_spec = pltpu.PrefetchScalarGridSpec(
        num_scalar_prefetch=4,
        grid=(num_cores, n_per_core),
        in_specs=[
            pl.BlockSpec((tile, d), a_map),
            pl.BlockSpec((tile, d), b_map),
            pl.BlockSpec((1, 1, tile), sq_map),
        ],
        out_specs=pl.BlockSpec((1, 8, 128), out_map),
        scratch_shapes=[pltpu.SMEM((num_cores,), jnp.float32)],
    )

    out = pl.pallas_call(
        kernel,
        out_shape=jax.ShapeDtypeStruct((num_cores, 8, 128), jnp.float32),
        grid_spec=grid_spec,
        compiler_params=pltpu.CompilerParams(
            dimension_semantics=("parallel", "arbitrary"),
            vmem_limit_bytes=vmem_limit),
    )(ii, jj, ww, neg_inv_bw, total, total, sq_rows)

    final_scale = 1.0 / (float(kernel_num) * float(batch_size * batch_size) * 2.0)
    # Per-core partials summed here (per-tile partials are reduced in f32 on the
    # MXU, so the SMEM running sum only sees O((N/tile)^2 / cores) additions).
    return jnp.sum(out[:, 0, 0]) * final_scale


def _mmd_ref(source, target, kernel_mul=2.0, kernel_num=5):
    """Pure-JAX reference (direct expand-difference form of the PyTorch code)."""
    total = jnp.concatenate([source, target], axis=0)
    diff = total[:, None, :] - total[None, :, :]
    dist = jnp.sum(diff * diff, axis=2)
    n = total.shape[0]
    b = source.shape[0]
    bw = jnp.sum(dist) / (n * n - n) / (kernel_mul ** (kernel_num // 2))
    kern = sum(jnp.exp(-dist / (bw * kernel_mul ** i))
               for i in range(kernel_num)) / kernel_num
    return jnp.mean(kern[:b, :b] + kern[b:, b:] - kern[:b, b:] - kern[b:, :b]) / 2.0


if __name__ == "__main__":
    key = jax.random.PRNGKey(0)
    k1, k2, k3, k4 = jax.random.split(key, 4)

    # Check 1: single tile pair (N=16 -> nt=1), default params, exp-squaring path.
    src = jax.random.normal(k1, (8, 32), dtype=jnp.float32)
    tgt = jax.random.normal(k2, (8, 32), dtype=jnp.float32) + 0.5
    loss = mmd_loss(src, tgt)
    jax.block_until_ready(loss)
    ref = _mmd_ref(src, tgt)
    assert jnp.allclose(loss, ref, rtol=5e-4, atol=1e-5), (loss, ref)

    # Check 2: triangular tile grid (N=192, tile=64 -> 6 pairs), mixed-sign tiles,
    # off-diagonal 2x symmetry weighting.
    src2 = jax.random.normal(k3, (96, 32), dtype=jnp.float32)
    tgt2 = jax.random.normal(k4, (96, 32), dtype=jnp.float32) + 0.25
    loss2 = mmd_loss(src2, tgt2, max_tile=64)
    jax.block_until_ready(loss2)
    ref2 = _mmd_ref(src2, tgt2)
    assert jnp.allclose(loss2, ref2, rtol=5e-4, atol=1e-5), (loss2, ref2)

    # Check 3: row padding/masking (N=200 padded to 256) + forced 2-slot core grid
    # (exercises the v7x split; runs sequentially on single-TC chips).
    src3 = src2[:100] * 1.3 + 0.1
    tgt3 = tgt2[:100]
    loss3 = mmd_loss(src3, tgt3, max_tile=64, num_cores=2)
    jax.block_until_ready(loss3)
    ref3 = _mmd_ref(src3, tgt3)
    assert jnp.allclose(loss3, ref3, rtol=5e-4, atol=1e-5), (loss3, ref3)

    # Check 4: kernel_mul != 2 -> generic exp ladder path.
    loss4 = mmd_loss(src, tgt, kernel_mul=3.0, kernel_num=4)
    jax.block_until_ready(loss4)
    ref4 = _mmd_ref(src, tgt, kernel_mul=3.0, kernel_num=4)
    assert jnp.allclose(loss4, ref4, rtol=5e-4, atol=1e-5), (loss4, ref4)

    # Check 5 (v6e/v7x only): bf16-exp fast path vs. the f32 kernel (loose tol).
    if _bf16_exp_ok():
        src5 = jax.random.normal(k3, (96, 32), dtype=jnp.float32)
        tgt5 = jax.random.normal(k4, (96, 32), dtype=jnp.float32) + 1.0
        l_f32 = mmd_loss(src5, tgt5, max_tile=64)
        l_bf16 = mmd_loss(src5, tgt5, max_tile=64, exp_dtype=jnp.bfloat16)
        jax.block_until_ready(l_bf16)
        assert bool(jnp.isfinite(l_bf16)), l_bf16
        assert jnp.allclose(l_bf16, l_f32, rtol=0.1, atol=0.02), (l_bf16, l_f32)

    print("KERNEL_OK")
</pallas_src>

<mosaic_0001>
module attributes {stable_mosaic.version = 11 : i64} {
  func.func @_mmd_tile_kernel(%arg0: i32, %arg1: i32, %arg2: memref<1xi32, #tpu.memory_space<smem>>, %arg3: memref<1xi32, #tpu.memory_space<smem>>, %arg4: memref<1xf32, #tpu.memory_space<smem>>, %arg5: memref<5xf32, #tpu.memory_space<smem>>, %arg6: memref<16x32xf32, #tpu.memory_space<vmem>>, %arg7: memref<16x32xf32, #tpu.memory_space<vmem>>, %arg8: memref<1x1x16xf32, #tpu.memory_space<vmem>>, %arg9: memref<1x8x128xf32, #tpu.memory_space<vmem>>, %arg10: memref<1xf32, #tpu.memory_space<smem>>) attributes {dimension_semantics = [#tpu.dimension_semantics<parallel>, #tpu.dimension_semantics<arbitrary>], iteration_bounds = array<i64: 1, 1>, scalar_prefetch = 4 : i64, scratch_operands = 1 : i64, tpu.core_type = #tpu.core_type<tc>, window_params = [{transform_indices = @transform_0, window_bounds = array<i64: 16, 32>}, {transform_indices = @transform_1, window_bounds = array<i64: 16, 32>}, {transform_indices = @transform_2, window_bounds = array<i64: 1, 1, 16>}, {transform_indices = @transform_3, window_bounds = array<i64: 1, 8, 128>}]} {
    %c1_i32 = arith.constant 1 : i32
    %0 = arith.muli %arg0, %c1_i32 : i32
    %1 = arith.addi %0, %arg1 : i32
    %c0_i32 = arith.constant 0 : i32
    %2 = arith.cmpi eq, %arg1, %c0_i32 : i32
    %3 = arith.extui %2 : i1 to i32
    %c0_i32_0 = arith.constant 0 : i32
    %4 = arith.cmpi ne, %3, %c0_i32_0 : i32
    scf.if %4 {
      %cst_24 = arith.constant 0.000000e+00 : f32
      %80 = arith.index_cast %arg0 : i32 to index
      %81 = memref.load %arg10[%80] : memref<1xf32, #tpu.memory_space<smem>>
      memref.store %cst_24, %arg10[%80] : memref<1xf32, #tpu.memory_space<smem>>
    } else {
    }
    %c0 = arith.constant 0 : index
    %c0_1 = arith.constant 0 : index
    %5 = vector.load %arg6[%c0, %c0_1] : memref<16x32xf32, #tpu.memory_space<vmem>>, vector<16x32xf32>
    %c0_2 = arith.constant 0 : index
    %c0_3 = arith.constant 0 : index
    %6 = vector.load %arg7[%c0_2, %c0_3] : memref<16x32xf32, #tpu.memory_space<vmem>>, vector<16x32xf32>
    %7 = arith.mulf %5, %5 : vector<16x32xf32>
    %cst = arith.constant dense<0.000000e+00> : vector<16xf32>
    %8 = vector.multi_reduction <add>, %7, %cst [1] : vector<16x32xf32> to vector<16xf32>
    %9 = vector.shape_cast %8 : vector<16xf32> to vector<16x1xf32>
    %c0_4 = arith.constant 0 : index
    %c0_5 = arith.constant 0 : index
    %c0_6 = arith.constant 0 : index
    %10 = vector.load %arg8[%c0_4, %c0_5, %c0_6] : memref<1x1x16xf32, #tpu.memory_space<vmem>>, vector<1x1x16xf32>
    %11 = vector.shape_cast %10 : vector<1x1x16xf32> to vector<1x16xf32>
    %cst_7 = arith.constant dense<0.000000e+00> : vector<16x16xf32>
    %12 = tpu.matmul %5, %6, %cst_7 {dimension_numbers = #tpu.dot_dimension_numbers<[1], [1], [0], [0], [0, 0, 1, 0], [], []>} : vector<16x32xf32>, vector<16x32xf32>, vector<16x16xf32> -> vector<16x16xf32>
    %13 = vector.broadcast %9 : vector<16x1xf32> to vector<16x16xf32>
    %14 = vector.broadcast %11 : vector<1x16xf32> to vector<16x16xf32>
    %15 = arith.addf %13, %14 : vector<16x16xf32>
    %cst_8 = arith.constant 2.000000e+00 : f32
    %16 = vector.broadcast %cst_8 : f32 to vector<16x16xf32>
    %17 = arith.mulf %16, %12 : vector<16x16xf32>
    %18 = arith.subf %15, %17 : vector<16x16xf32>
    %cst_9 = arith.constant 0.000000e+00 : f32
    %19 = vector.broadcast %cst_9 : f32 to vector<16x16xf32>
    %20 = arith.maximumf %18, %19 : vector<16x16xf32>
    %c4 = arith.constant 4 : index
    %21 = memref.load %arg5[%c4] : memref<5xf32, #tpu.memory_space<smem>>
    %22 = vector.broadcast %21 : f32 to vector<16x16xf32>
    %23 = arith.mulf %20, %22 : vector<16x16xf32>
    %24 = math.exp %23 : vector<16x16xf32>
    %25 = arith.mulf %24, %24 : vector<16x16xf32>
    %26 = arith.addf %24, %25 : vector<16x16xf32>
    %27 = arith.mulf %25, %25 : vector<16x16xf32>
    %28 = arith.addf %26, %27 : vector<16x16xf32>
    %29 = arith.mulf %27, %27 : vector<16x16xf32>
    %30 = arith.addf %28, %29 : vector<16x16xf32>
    %31 = arith.mulf %29, %29 : vector<16x16xf32>
    %32 = arith.addf %30, %31 : vector<16x16xf32>
    %33 = arith.index_cast %1 : i32 to index
    %34 = memref.load %arg2[%33] : memref<1xi32, #tpu.memory_space<smem>>
    %c16_i32 = arith.constant 16 : i32
    %35 = arith.muli %34, %c16_i32 : i32
    %36 = arith.index_cast %1 : i32 to index
    %37 = memref.load %arg3[%36] : memref<1xi32, #tpu.memory_space<smem>>
    %c16_i32_10 = arith.constant 16 : i32
    %38 = arith.muli %37, %c16_i32_10 : i32
    %39 = tpu.iota {dimensions = array<i32: 0>} : vector<16x1xi32>
    %40 = vector.broadcast %35 : i32 to vector<16x1xi32>
    %41 = arith.addi %40, %39 : vector<16x1xi32>
    %42 = tpu.iota {dimensions = array<i32: 0>} : vector<16x1xi32>
    %43 = vector.broadcast %38 : i32 to vector<16x1xi32>
    %44 = arith.addi %43, %42 : vector<16x1xi32>
    %c16_i32_11 = arith.constant 16 : i32
    %45 = vector.broadcast %c16_i32_11 : i32 to vector<16x1xi32>
    %46 = arith.cmpi slt, %41, %45 : vector<16x1xi32>
    %c8_i32 = arith.constant 8 : i32
    %47 = vector.broadcast %c8_i32 : i32 to vector<16x1xi32>
    %48 = arith.cmpi slt, %41, %47 : vector<16x1xi32>
    %cst_12 = arith.constant 1.000000e+00 : f32
    %cst_13 = arith.constant -1.000000e+00 : f32
    %49 = vector.broadcast %cst_12 : f32 to vector<16x1xf32>
    %50 = vector.broadcast %cst_13 : f32 to vector<16x1xf32>
    %51 = arith.select %48, %49, %50 : vector<16x1xi1>, vector<16x1xf32>
    %cst_14 = arith.constant 0.000000e+00 : f32
    %52 = vector.broadcast %cst_14 : f32 to vector<16x1xf32>
    %53 = arith.select %46, %51, %52 : vector<16x1xi1>, vector<16x1xf32>
    %c16_i32_15 = arith.constant 16 : i32
    %54 = vector.broadcast %c16_i32_15 : i32 to vector<16x1xi32>
    %55 = arith.cmpi slt, %44, %54 : vector<16x1xi32>
    %c8_i32_16 = arith.constant 8 : i32
    %56 = vector.broadcast %c8_i32_16 : i32 to vector<16x1xi32>
    %57 = arith.cmpi slt, %44, %56 : vector<16x1xi32>
    %cst_17 = arith.constant 1.000000e+00 : f32
    %cst_18 = arith.constant -1.000000e+00 : f32
    %58 = vector.broadcast %cst_17 : f32 to vector<16x1xf32>
    %59 = vector.broadcast %cst_18 : f32 to vector<16x1xf32>
    %60 = arith.select %57, %58, %59 : vector<16x1xi1>, vector<16x1xf32>
    %cst_19 = arith.constant 0.000000e+00 : f32
    %61 = vector.broadcast %cst_19 : f32 to vector<16x1xf32>
    %62 = arith.select %55, %60, %61 : vector<16x1xi1>, vector<16x1xf32>
    %cst_20 = arith.constant dense<0.000000e+00> : vector<16x1xf32>
    %63 = tpu.matmul %32, %62, %cst_20 {dimension_numbers = #tpu.dot_dimension_numbers<[1], [0], [0], [1], [0, 0, 1, 1], [], []>} : vector<16x16xf32>, vector<16x1xf32>, vector<16x1xf32> -> vector<16x1xf32>
    %64 = arith.mulf %53, %63 : vector<16x1xf32>
    %65 = vector.shape_cast %64 : vector<16x1xf32> to vector<1x16x1xf32>
    %cst_21 = arith.constant dense<0.000000e+00> : vector<1xf32>
    %66 = vector.multi_reduction <add>, %65, %cst_21 [1, 2] : vector<1x16x1xf32> to vector<1xf32>
    %67 = vector.shape_cast %66 : vector<1xf32> to vector<1x1x1xf32>
    %68 = vector.extract %67[0, 0, 0] : f32 from vector<1x1x1xf32>
    %69 = arith.index_cast %arg0 : i32 to index
    %70 = memref.load %arg10[%69] : memref<1xf32, #tpu.memory_space<smem>>
    %71 = arith.index_cast %1 : i32 to index
    %72 = memref.load %arg4[%71] : memref<1xf32, #tpu.memory_space<smem>>
    %73 = arith.mulf %72, %68 : f32
    %74 = arith.addf %70, %73 : f32
    %75 = arith.index_cast %arg0 : i32 to index
    %76 = memref.load %arg10[%75] : memref<1xf32, #tpu.memory_space<smem>>
    memref.store %74, %arg10[%75] : memref<1xf32, #tpu.memory_space<smem>>
    %c0_i32_22 = arith.constant 0 : i32
    %77 = arith.cmpi eq, %arg1, %c0_i32_22 : i32
    %78 = arith.extui %77 : i1 to i32
    %c0_i32_23 = arith.constant 0 : i32
    %79 = arith.cmpi ne, %78, %c0_i32_23 : i32
    scf.if %79 {
      %80 = arith.index_cast %arg0 : i32 to index
      %81 = memref.load %arg10[%80] : memref<1xf32, #tpu.memory_space<smem>>
      %cst_24 = arith.constant 0.000000e+00 : f32
      %82 = vector.broadcast %cst_24 : f32 to vector<1x8x128xf32>
      %83 = vector.broadcast %81 : f32 to vector<1x8x128xf32>
      %84 = arith.addf %83, %82 : vector<1x8x128xf32>
      %c0_25 = arith.constant 0 : index
      %c0_26 = arith.constant 0 : index
      %c0_27 = arith.constant 0 : index
      %85 = vector.load %arg9[%c0_25, %c0_26, %c0_27] : memref<1x8x128xf32, #tpu.memory_space<vmem>>, vector<1x8x128xf32>
      tpu.vector_store %arg9[%c0_25, %c0_26, %c0_27], %84 {strides = array<i32>} : memref<1x8x128xf32, #tpu.memory_space<vmem>>, vector<1x8x128xf32>,
    } else {
    }
    return
  }
  func.func @transform_0(%arg0: i32, %arg1: i32, %arg2: memref<1xi32, #tpu.memory_space<smem>>, %arg3: memref<1xi32, #tpu.memory_space<smem>>, %arg4: memref<1xf32, #tpu.memory_space<smem>>, %arg5: memref<5xf32, #tpu.memory_space<smem>>) -> (i32, i32) {
    %c1_i32 = arith.constant 1 : i32
    %0 = arith.muli %arg0, %c1_i32 : i32
    %1 = arith.addi %0, %arg1 : i32
    %2 = arith.index_cast %1 : i32 to index
    %3 = memref.load %arg2[%2] : memref<1xi32, #tpu.memory_space<smem>>
    %c0_i32 = arith.constant 0 : i32
    %c0_i32_0 = arith.constant 0 : i32
    return %3, %c0_i32 : i32, i32
  }
  func.func @transform_1(%arg0: i32, %arg1: i32, %arg2: memref<1xi32, #tpu.memory_space<smem>>, %arg3: memref<1xi32, #tpu.memory_space<smem>>, %arg4: memref<1xf32, #tpu.memory_space<smem>>, %arg5: memref<5xf32, #tpu.memory_space<smem>>) -> (i32, i32) {
    %c1_i32 = arith.constant 1 : i32
    %0 = arith.muli %arg0, %c1_i32 : i32
    %1 = arith.addi %0, %arg1 : i32
    %2 = arith.index_cast %1 : i32 to index
    %3 = memref.load %arg3[%2] : memref<1xi32, #tpu.memory_space<smem>>
    %c0_i32 = arith.constant 0 : i32
    %c0_i32_0 = arith.constant 0 : i32
    return %3, %c0_i32 : i32, i32
  }
  func.func @transform_2(%arg0: i32, %arg1: i32, %arg2: memref<1xi32, #tpu.memory_space<smem>>, %arg3: memref<1xi32, #tpu.memory_space<smem>>, %arg4: memref<1xf32, #tpu.memory_space<smem>>, %arg5: memref<5xf32, #tpu.memory_space<smem>>) -> (i32, i32, i32) {
    %c1_i32 = arith.constant 1 : i32
    %0 = arith.muli %arg0, %c1_i32 : i32
    %1 = arith.addi %0, %arg1 : i32
    %2 = arith.index_cast %1 : i32 to index
    %3 = memref.load %arg3[%2] : memref<1xi32, #tpu.memory_space<smem>>
    %c0_i32 = arith.constant 0 : i32
    %c0_i32_0 = arith.constant 0 : i32
    %c0_i32_1 = arith.constant 0 : i32
    return %3, %c0_i32, %c0_i32_0 : i32, i32, i32
  }
  func.func @transform_3(%arg0: i32, %arg1: i32, %arg2: memref<1xi32, #tpu.memory_space<smem>>, %arg3: memref<1xi32, #tpu.memory_space<smem>>, %arg4: memref<1xf32, #tpu.memory_space<smem>>, %arg5: memref<5xf32, #tpu.memory_space<smem>>) -> (i32, i32, i32) {
    %c0_i32 = arith.constant 0 : i32
    %c0_i32_0 = arith.constant 0 : i32
    %c0_i32_1 = arith.constant 0 : i32
    return %arg0, %c0_i32, %c0_i32_0 : i32, i32, i32
  }
}

</mosaic_0001>

<llo_original>
// kernel: tpu_custom_call.1
$region0: #{tpu_custom_call.1}
  #allocation0 [shape = 'u32[]', space=smem, size = 0x4, offset = 0x4, fixed_abs, tag = 'smem constant byte address 0x4 - core index']
  #allocation1 [shape = 'u32[72,128]{1,0:T(1,128)}', space=vmem, size = 0x9000, scoped, tag = 'internal scratch']
  #allocation2 [shape = 'f32[1]{0:T(128)}', space=smem, size = 0x200, scoped, tag = 'scratch operand']
  #allocation3 [shape = 's32[1]{0}', space=sflag, size = 0x4, scoped, tag = 'scoped memory for tpu_custom_call.1']
  #allocation4 [shape = 's32[1]{0:T(128)S(6)}', space=smem, size = 0x200, scoped, tag = 'prefetched SMEM operand 0']
  #allocation5 [shape = 's32[1]{0:T(128)S(6)}', space=smem, size = 0x200, scoped, tag = 'prefetched SMEM operand 1']
  #allocation6 [shape = 'f32[1]{0:T(128)S(6)}', space=smem, size = 0x200, scoped, tag = 'prefetched SMEM operand 2']
  #allocation7 [shape = 'u8[512]{0}', space=smem, size = 0x200, scoped, tag = 'prefetched SMEM operand 3']
  %s0 = inlined_call_operand.<no memory space> [shape: s32[1], index: 0, kind: input, shape index: {}]
  %s1 = inlined_call_operand.<no memory space> [shape: s32[1], index: 1, kind: input, shape index: {}]
  %s2 = inlined_call_operand.<no memory space> [shape: f32[1], index: 2, kind: input, shape index: {}]
  %s3 = inlined_call_operand.vmem [shape: f32[5], index: 3, kind: input, shape index: {}]
  %s4 = inlined_call_operand.hbm [shape: f32[16,32], index: 4, kind: input, shape index: {}]
  %s5 = inlined_call_operand.hbm [shape: f32[16,32], index: 5, kind: input, shape index: {}]
  %s6 = inlined_call_operand.vmem [shape: f32[1,1,16], index: 6, kind: input, shape index: {}]
  %s7 = inlined_call_operand.hbm [shape: f32[1,8,128], index: 7, kind: output, shape index: {}]
  %s8 = sld [smem:[#allocation0]]
  $region38: #{tpu_custom_call.1} parent=0
    _
  %s10 = ssub.s32 1, %s8
  %s11 = scalar_select 0, %s10, %s8
  %12 = sst [smem:[#allocation4]] %s0
  %13 = sst [smem:[#allocation5]] %s1
  %14 = sst [smem:[#allocation6]] %s2
  %s16 = sshll.u32 %s3, 4
  %s17 = int_to_ptr.vmem [resolvable:$true] %s16
  %19 = dma.vmem_to_smem %s17, 16, [#allocation7], [#allocation3]
  %21 = dma.done [#allocation3], 16
  %22 = sfence
  $region1: #{tpu_custom_call.1} parent=0
    #allocation8 [shape = 'u8[8192]{0}', space=vmem, size = 0x2000, scoped, tag = 'input window, operand 4, single buffered']
    #allocation9 [shape = 's32[1]{0}', space=sflag, size = 0x4, scoped, tag = 'scoped memory for tpu_custom_call.1']
    #allocation10 [shape = 's32[1]{0}', space=sflag, size = 0x4, scoped, tag = 'scoped memory for tpu_custom_call.1']
    #allocation11 [shape = 'u8[8192]{0}', space=vmem, size = 0x2000, scoped, tag = 'input window, operand 5, single buffered']
    #allocation12 [shape = 's32[1]{0}', space=sflag, size = 0x4, scoped, tag = 'scoped memory for tpu_custom_call.1']
    #allocation13 [shape = 'u8[4096]{0}', space=vmem, size = 0x1000, scoped, tag = 'output window, operand 0, single buffered']
    %23 = vsyncpa [#allocation9], 0
    %24 = vsyncpa [#allocation12], 0
    %25 = vsyncpa [#allocation10], 0
    // Predicated region
    $region2: #{tpu_custom_call.1} parent=1 // pred_check
      _
    $region3: #{tpu_custom_call.1} parent=1 // pred_check_branch
      %27 = sbr.rel (0) target = $region5
    $region4: #{tpu_custom_call.1} parent=1 // pred_region
      %s28 = sadd.s32 0, 0
      %s29 = sld [smem:[#allocation4 + %s28]]
      %s30 = smul.u32 2, %s29
      %32 = vsyncadd [#allocation9], 0
      %s33 = smul.addr %s30, 8
      %s34 = scalar_lea.hbm %s4, %s33
      %s35 = sshll.u32 %s34, 4
      %s36 = int_to_ptr.hbm [resolvable:$true] %s35
      %s37 = sshll.u32 [#allocation8], 4
      %s38 = int_to_ptr.vmem [resolvable:$true] %s37
      %43 = dma.hbm_to_vmem [thread:$0]  %s36, 256, %s38, [#allocation9], 128, 128, 8
    $region5: #{tpu_custom_call.1} parent=1 // pred_fallthru
      _
    // Predicated region
    $region6: #{tpu_custom_call.1} parent=1 // pred_check
      _
    $region7: #{tpu_custom_call.1} parent=1 // pred_check_branch
      %45 = sbr.rel (0) target = $region9
    $region8: #{tpu_custom_call.1} parent=1 // pred_region
      %s46 = sadd.s32 0, 0
      %s47 = sld [smem:[#allocation5 + %s46]]
      %s48 = smul.u32 2, %s47
      %50 = vsyncadd [#allocation12], 0
      %s51 = smul.addr %s48, 8
      %s52 = scalar_lea.hbm %s5, %s51
      %s53 = sshll.u32 %s52, 4
      %s54 = int_to_ptr.hbm [resolvable:$true] %s53
      %s55 = sshll.u32 [#allocation11], 4
      %s56 = int_to_ptr.vmem [resolvable:$true] %s55
      %61 = dma.hbm_to_vmem [thread:$0]  %s54, 256, %s56, [#allocation12], 128, 128, 8
    $region9: #{tpu_custom_call.1} parent=1 // pred_fallthru
      _
    // Predicated region
    $region10: #{tpu_custom_call.1} parent=1 // pred_check
      _
    $region11: #{tpu_custom_call.1} parent=1 // pred_check_branch
      %63 = sbr.rel (0) target = $region13
    $region12: #{tpu_custom_call.1} parent=1 // pred_region
      %s64 = sadd.s32 0, 0
      %s65 = sld [smem:[#allocation5 + %s64]]
      %p66 = scmp.lt.s32.totalorder %s65, 0
      %s67 = scalar_select %p66, %s65, 0
      %s68 = scalar_lea.vmem %s6, %s67
      %s69 = sadd.s32 0, 0
      %s70 = sld [smem:[#allocation5 + %s69]]
    $region13: #{tpu_custom_call.1} parent=1 // pred_fallthru
      _
    // Predicated region
    $region14: #{tpu_custom_call.1} parent=1 // pred_check
      _
    $region15: #{tpu_custom_call.1} parent=1 // pred_check_branch
      %72 = sbr.rel (0) target = $region17
    $region16: #{tpu_custom_call.1} parent=1 // pred_region
      %74 = dma.done [#allocation9], 256
    $region17: #{tpu_custom_call.1} parent=1 // pred_fallthru
      _
    // Predicated region
    $region18: #{tpu_custom_call.1} parent=1 // pred_check
      _
    $region19: #{tpu_custom_call.1} parent=1 // pred_check_branch
      %76 = sbr.rel (0) target = $region21
    $region20: #{tpu_custom_call.1} parent=1 // pred_region
      %78 = dma.done [#allocation12], 256
    $region21: #{tpu_custom_call.1} parent=1 // pred_fallthru
      _
    %s79 = sadd.s32 0, 0
    %s80 = sld [smem:[#allocation5 + %s79]]
    %p81 = scmp.lt.s32.totalorder %s80, 0
    %s82 = scalar_select %p81, %s80, 0
    %s83 = scalar_lea.vmem %s6, %s82
    %s84 = sadd.s32 0, 0
    %s85 = sld [smem:[#allocation4 + %s84]]
    %s86 = smul.u32 2, %s85
    %s87 = sadd.s32 0, 0
    %s88 = sld [smem:[#allocation5 + %s87]]
    %s89 = smul.u32 2, %s88
    %s90 = sadd.s32 0, 0
    %s91 = sld [smem:[#allocation5 + %s90]]
    %p92 = scmp.lt.s32.totalorder %s91, 0
    %s93 = scalar_select %p92, %s91, 0
    %s94 = scalar_lea.vmem %s6, %s93
    %s95 = sadd.s32 0, 0
    %s96 = sld [smem:[#allocation5 + %s95]]
    %s97 = sadd.s32 0, 0
    %p98 = scmp.eq.s32.totalorder 0, 0
    // Predicated region
    $region22: #{tpu_custom_call.1} parent=1 // pred_check
      %p99 = pneg %p98
    $region23: #{tpu_custom_call.1} parent=1 // pred_check_branch
      %101 = sbr.rel (%p99) target = $region25
    $region24: #{tpu_custom_call.1} parent=1 // pred_region
      %s102 = scalar_lea.smem [#allocation2], 0
      %103 = sst [smem:[%s102]] 0.0
    $region25: #{tpu_custom_call.1} parent=1 // pred_fallthru
      _
    %v104 = vld [vmem:[#allocation8] sm:$0xff]
    %v105 = vld [vmem:[#allocation8 + $0x8] sm:$0xff]
    %v106 = vld [vmem:[#allocation11] sm:$0xff]
    %v107 = vld [vmem:[#allocation11 + $0x8] sm:$0xff]
    %v108 = vmul.f32 %v104, %v104
    %v109 = vmul.f32 %v105, %v105
    %vm110 = vcmask 261120
    %v111 = vsel %vm110, %v108, 0.0
    %112 = vadd.xlane.f32.xlu0 %v111
    %v113 = vpop.xlane.xlu0 %112
    %v114 = vsel %vm110, %v109, 0.0
    %115 = vadd.xlane.f32.xlu0 %v114
    %v116 = vpop.xlane.xlu0 %115
    %v117 = vld [vmem:[%s94] sm:$0x1]
    %v119 = vsel %vm110, %v104, 0
    %v122 = vsel %vm110, %v105, 0
    %v125 = vsel %vm110, %v106, 0
    %v128 = vsel %vm110, %v107, 0
    %130 = vmatpush.xpose.msra.mxu0 0.0
    %131 = vmatpush.xpose.msra.mxu0 0.0
    %132 = vmatpush.xpose.msra.mxu0 0.0
    %133 = vmatpush.xpose.msra.mxu0 0.0
    %134 = vmatpush.xpose.msra.mxu0 0.0
    %135 = vmatpush.xpose.msra.mxu0 0.0
    %136 = vmatpush.xpose.msra.mxu0 0.0
    %137 = vmatpush.xpose.msra.mxu0 0.0
    %138 = vmatpush.xpose.msra.mxu0 0.0
    %139 = vmatpush.xpose.msra.mxu0 0.0
    %140 = vmatpush.xpose.msra.mxu0 0.0
    %141 = vmatpush.xpose.msra.mxu0 0.0
    %142 = vmatpush.xpose.msra.mxu0 0.0
    %143 = vmatpush.xpose.msra.mxu0 0.0
    %144 = vmatpush.xpose.msra.mxu0 %v128
    %145 = vmatpush.xpose.msra.mxu0 %v125
    %146 = vmatmul.f32.gmra.mxu0 %v119
    %v147 = vpop.f32.mrf.mxu0
    %v148 = vadd.f32 0.0, %v147
    %149 = vmatmul.f32.gmra.mxu0 %v122
    %v150 = vpop.f32.mrf.mxu0
    %v151 = vadd.f32 0.0, %v150
    %152 = vdwg.mxu0
    %v154 = vperm.slane %v117, 0
    %v156 = vadd.f32 %v113, %v154
    %v157 = vadd.f32 %v116, %v154
    %v158 = vmul.f32 %v148, 2.0
    %v159 = vmul.f32 %v151, 2.0
    %v160 = vsub.f32 %v156, %v158
    %v161 = vsub.f32 %v157, %v159
    %v162 = vmax.f32 %v160, 0.0
    %v163 = vmax.f32 %v161, 0.0
    %s164 = sld [smem:[#allocation7 + $0x4]]
    %v165 = vstv %s164
    %v166 = vmul.f32 %v162, %v165
    %v167 = vmul.f32 %v163, %v165
    %v168 = vmul.f32 %v166, 1.442695
    %v169 = vpow.pop %v168
    %v170 = vmul.f32 %v167, 1.442695
    %v171 = vpow.pop %v170
    %v172 = vmul.f32 %v169, %v169
    %v173 = vmul.f32 %v171, %v171
    %v174 = vadd.f32 %v169, %v172
    %v175 = vadd.f32 %v171, %v173
    %v176 = vmul.f32 %v172, %v172
    %v177 = vmul.f32 %v173, %v173
    %v178 = vadd.f32 %v174, %v176
    %v179 = vadd.f32 %v175, %v177
    %v180 = vmul.f32 %v176, %v176
    %v181 = vmul.f32 %v177, %v177
    %v182 = vadd.f32 %v178, %v180
    %v183 = vadd.f32 %v179, %v181
    %v184 = vmul.f32 %v180, %v180
    %v185 = vmul.f32 %v181, %v181
    %v186 = vadd.f32 %v182, %v184
    %v187 = vadd.f32 %v183, %v185
    %s188 = sld [smem:[#allocation4 + %s97]]
    %s189 = smul.u32 %s188, 16
    %s190 = sld [smem:[#allocation5 + %s97]]
    %s191 = smul.u32 %s190, 16
    %v192 = vlaneseq
    %v193 = vshrl.u32 %v192, 7
    %v194 = vadd.s32 %v193, 8
    %v195 = vstv %s189
    %v196 = vadd.s32 %v195, %v193
    %v197 = vadd.s32 %v195, %v194
    %v198 = vstv %s191
    %v199 = vadd.s32 %v198, %v193
    %v200 = vadd.s32 %v198, %v194
    %vm201 = vcmp.lt.s32.totalorder %v196, 16
    %vm202 = vcmp.lt.s32.totalorder %v197, 16
    %vm203 = vcmp.lt.s32.totalorder %v196, 8
    %vm204 = vcmp.lt.s32.totalorder %v197, 8
    %v205 = vsel %vm203, 1.0, -1.0
    %v206 = vsel %vm204, 1.0, -1.0
    %v207 = vsel %vm201, %v205, 0.0
    %v208 = vsel %vm202, %v206, 0.0
    %vm209 = vcmp.lt.s32.totalorder %v199, 16
    %vm210 = vcmp.lt.s32.totalorder %v200, 16
    %vm211 = vcmp.lt.s32.totalorder %v199, 8
    %vm212 = vcmp.lt.s32.totalorder %v200, 8
    %v213 = vsel %vm211, 1.0, -1.0
    %v214 = vsel %vm212, 1.0, -1.0
    %v215 = vsel %vm209, %v213, 0.0
    %v216 = vsel %vm210, %v214, 0.0
    %vm217 = vcmask 130048
    %v219 = vsel %vm217, %v186, 0
    %v222 = vsel %vm217, %v187, 0
    %224 = vmatpush.msra.mxu0 0.0
    %225 = vmatpush.msra.mxu0 0.0
    %226 = vmatpush.msra.mxu0 0.0
    %227 = vmatpush.msra.mxu0 0.0
    %228 = vmatpush.msra.mxu0 0.0
    %229 = vmatpush.msra.mxu0 0.0
    %230 = vmatpush.msra.mxu0 0.0
    %231 = vmatpush.msra.mxu0 0.0
    %232 = vmatpush.msra.mxu0 0.0
    %233 = vmatpush.msra.mxu0 0.0
    %234 = vmatpush.msra.mxu0 0.0
    %235 = vmatpush.msra.mxu0 0.0
    %236 = vmatpush.msra.mxu0 0.0
    %237 = vmatpush.msra.mxu0 0.0
    %238 = vmatpush.msra.mxu0 %v216
    %239 = vmatpush.msra.mxu0 %v215
    %240 = vmatmul.f32.gmra.mxu0 %v219
    %v241 = vpop.f32.mrf.mxu0
    %v242 = vadd.f32 0.0, %v241
    %243 = vmatmul.f32.gmra.mxu0 %v222
    %v244 = vpop.f32.mrf.mxu0
    %v245 = vadd.f32 0.0, %v244
    %246 = vdwg.mxu0
    %v247 = vmul.f32 %v207, %v242
    %v248 = vmul.f32 %v208, %v245
    %vm249 = vcmask 7168
    %v250 = vsel %vm249, %v247, 0.0
    %v251 = vsel %vm249, %v248, 0.0
    %v252 = vadd.f32 %v250, %v251
    %253 = vadd.xlane.f32.xlu0 %v252
    %v254 = vpop.xlane.xlu0 %253
    %v255 = vrot.slane %v254, 4
    %v256 = vadd.f32 %v254, %v255
    %v257 = vrot.slane %v256, 2
    %v258 = vadd.f32 %v256, %v257
    %v259 = vrot.slane %v258, 1
    %v260 = vadd.f32 %v258, %v259
    %s261 = vtos %v260
    %s262 = sld [smem:[#allocation2]]
    %s263 = sld [smem:[#allocation6 + %s97]]
    %s264 = smul.f32 %s263, %s261
    %s265 = sadd.f32 %s262, %s264
    %s266 = scalar_lea.smem [#allocation2], 0
    %267 = sst [smem:[%s266]] %s265
    // Predicated region
    $region26: #{tpu_custom_call.1} parent=1 // pred_check
      %p268 = pneg %p98
    $region27: #{tpu_custom_call.1} parent=1 // pred_check_branch
      %270 = sbr.rel (%p268) target = $region29
    $region28: #{tpu_custom_call.1} parent=1 // pred_region
      %s271 = sld [smem:[#allocation2]]
      %v272 = vstv %s271
      %v273 = vadd.f32 %v272, 0.0
      %274 = vst [vmem:[#allocation13] sm:$0xff] %v273
    $region29: #{tpu_custom_call.1} parent=1 // pred_fallthru
      _
    // Predicated region
    $region30: #{tpu_custom_call.1} parent=1 // pred_check
      _
    $region31: #{tpu_custom_call.1} parent=1 // pred_check_branch
      %276 = sbr.rel (0) target = $region33
    $region32: #{tpu_custom_call.1} parent=1 // pred_region
      %278 = vsyncadd [#allocation10], 0
      %s280 = sshll.u32 [#allocation13], 4
      %s281 = int_to_ptr.vmem [resolvable:$true] %s280
      %s282 = sshll.u32 %s7, 4
      %s283 = int_to_ptr.hbm [resolvable:$true] %s282
      %285 = dma.vmem_to_hbm [thread:$0]  %s281, 128, %s283, [#allocation10]
    $region33: #{tpu_custom_call.1} parent=1 // pred_fallthru
      _
    // Predicated region
    $region34: #{tpu_custom_call.1} parent=1 // pred_check
      _
    $region35: #{tpu_custom_call.1} parent=1 // pred_check_branch
      %287 = sbr.rel (0) target = $region37
    $region36: #{tpu_custom_call.1} parent=1 // pred_region
      %289 = dma.done [#allocation10], 128
    $region37: #{tpu_custom_call.1} parent=1 // pred_fallthru
      _
    %290 = vsyncpa [#allocation9], 1
    %291 = vsyncpa [#allocation12], 1
    %292 = vsyncpa [#allocation10], 1

</llo_original>
